<compile_context>
chip_gen: v5e
topology: v5e:2x2
jax: 0.10.0
libtpu: 0.0.40
codegen_flags: <defaults>
</compile_context>

<pallas_src>
import functools

import jax
import jax.numpy as jnp
from jax.experimental import pallas as pl
from jax.experimental.pallas import tpu as pltpu


# ----------------------------------------------------------------------------
# Fused kernel: one grid step == a block of `gb` graphs
# (normalization + 2 GCN layers + fc head per graph, statically unrolled)
# ----------------------------------------------------------------------------
def m_gcn_fused_kernel(lmb_ref, fc2b_ref,               # scalar prefetch (SMEM)
                       adj_ref, feat_ref, slab_ref,     # VMEM blocks
                       out_ref,
                       *, gb, feat_dim, gcn_hidden, gcn_feat, fc_hidden,
                       o_gc1, o_gc2, o_fc1, matmul_dtype):
    b = pl.program_id(0)
    f32 = jnp.float32
    eps_bn = 1e-5
    F, H, C, FH = feat_dim, gcn_hidden, gcn_feat, fc_hidden

    # ---- shared parameters: one resident slab, sliced / cast once ----------
    gc1_b = slab_ref[0:1, 0:H]
    gc2_b = slab_ref[1:2, 0:C]
    bn1_g = slab_ref[2:3, 0:C]
    bn1_b = slab_ref[3:4, 0:C]
    fc1_b = slab_ref[4:5, 0:FH]
    bn2_g = slab_ref[5:6, 0:FH]
    bn2_b = slab_ref[6:7, 0:FH]
    fc2_w = slab_ref[7:8, 0:FH]            # final Linear weight as a lane row
    fc2_b = fc2b_ref[0]                    # scalar (SMEM)

    gc1_w = slab_ref[o_gc1:o_gc1 + F, 0:H].astype(matmul_dtype)
    gc2_w = slab_ref[o_gc2:o_gc2 + H, 0:C].astype(matmul_dtype)
    fc1_w = slab_ref[o_fc1:o_fc1 + C, 0:FH].astype(matmul_dtype)

    def mm(a_f32, w_md):
        return jnp.dot(a_f32.astype(matmul_dtype), w_md,
                       preferred_element_type=f32)

    def bn(x, gamma, beta):
        # Training-mode BatchNorm; single reduction pass (E[x^2] - E[x]^2).
        mu = jnp.mean(x, axis=0, keepdims=True)
        var = jnp.maximum(jnp.mean(x * x, axis=0, keepdims=True) - mu * mu, 0.0)
        return (x - mu) * jax.lax.rsqrt(var + eps_bn) * gamma + beta

    # ---- per-graph GCN + fc head (static unroll over graphs in this block) --
    for i in range(gb):
        lmb = lmb_ref[b * gb + i]
        adj = adj_ref[i]                   # (N, N), already in matmul_dtype
        x0 = feat_ref[i]                   # (N, F), f32

        # Degree of (adj + lmb*I): rowsum(adj) + lmb (eye never materialized).
        d = jnp.sum(adj.astype(f32), axis=1, keepdims=True) + lmb       # (N, 1)
        # Guarded rsqrt (no-op for valid positive-degree graphs / padding rows).
        dinv = jnp.where(d > 0.0, jax.lax.rsqrt(jnp.maximum(d, 1e-30)), 0.0)
        lmb_dinv2 = lmb * dinv * dinv

        def propagate(x_f32):
            # D^-1/2 (adj + lmb*I) D^-1/2 @ x, factored so adj is used as-is
            # (no eye, no scaled adjacency copy, no per-call adj re-cast).
            xm = (dinv * x_f32).astype(matmul_dtype)
            return dinv * jnp.dot(adj, xm, preferred_element_type=f32) \
                + lmb_dinv2 * x_f32

        # GCN branch
        h = jnp.maximum(mm(propagate(x0), gc1_w) + gc1_b, 0.0)          # (N, H)
        h = jnp.maximum(mm(propagate(h), gc2_w) + gc2_b, 0.0)           # (N, C)

        # fc head: BN -> Linear -> BN -> LeakyReLU(0.01) -> Linear(->1)
        x = bn(h, bn1_g, bn1_b)
        y = mm(x, fc1_w) + fc1_b                                        # (N, FH)
        y = bn(y, bn2_g, bn2_b)
        y = jnp.where(y > 0.0, y, 0.01 * y)

        # Final Linear(FH -> 1): VPU multiply + lane reduction; lane-dense row.
        out_ref[i, :] = jnp.sum(y * fc2_w, axis=1) + fc2_b              # (N,)


# ----------------------------------------------------------------------------
# Parameter slab packing (one DMA for every shared weight / bias / BN vector)
# ----------------------------------------------------------------------------
def _round8(v):
    return ((v + 7) // 8) * 8


def _slab_offsets(F, H, C):
    o_gc1 = 16                     # rows 0..8 hold the 1-D params (padded to 16)
    o_gc2 = o_gc1 + _round8(F)
    o_fc1 = o_gc2 + _round8(H)
    rows = _round8(o_fc1 + _round8(C))
    return o_gc1, o_gc2, o_fc1, rows


def _pack_params(params, F, H, C, FH):
    o_gc1, o_gc2, o_fc1, rows = _slab_offsets(F, H, C)
    slab = jnp.zeros((rows, 128), jnp.float32)

    def put_vec(s, r, v):
        v = jnp.asarray(v, jnp.float32).reshape(-1)
        assert v.shape[0] <= 128, "packed param exceeds 128 lanes"
        return s.at[r, : v.shape[0]].set(v)

    def put_mat(s, r0, m):
        m = jnp.asarray(m, jnp.float32)
        assert m.shape[1] <= 128, "packed weight exceeds 128 lanes"
        return s.at[r0:r0 + m.shape[0], : m.shape[1]].set(m)

    slab = put_vec(slab, 0, params["gc1_b"])
    slab = put_vec(slab, 1, params["gc2_b"])
    slab = put_vec(slab, 2, params["bn1_g"])
    slab = put_vec(slab, 3, params["bn1_b"])
    slab = put_vec(slab, 4, params["fc1_b"])
    slab = put_vec(slab, 5, params["bn2_g"])
    slab = put_vec(slab, 6, params["bn2_b"])
    slab = put_vec(slab, 7, params["fc2_w"])          # (FH, 1) -> lane row
    slab = put_mat(slab, o_gc1, params["gc1_w"])      # (F, H)
    slab = put_mat(slab, o_gc2, params["gc2_w"])      # (H, C)
    slab = put_mat(slab, o_fc1, params["fc1_w"])      # (C, FH)
    return slab


# ----------------------------------------------------------------------------
# Per-generation VMEM limit and graphs-per-block selection
# ----------------------------------------------------------------------------
def _vmem_limit_bytes():
    phys = 128 * 1024 * 1024
    try:
        info = pltpu.get_tpu_info()
        phys = int(getattr(info, "vmem_capacity_bytes", phys))
    except Exception:
        pass
    # Leave headroom for compiler scratch / double-buffering:
    #   v7x (64 MiB physical)  -> ~48 MiB ; v5e/v6e (128 MiB) -> ~109 MiB.
    return max(32 * 1024 * 1024, min(phys - (16 << 20), int(phys * 0.85)))


def _choose_graphs_per_block(G, N, adj_itemsize, *, max_gb=8,
                             adj_block_budget=4 << 20):
    fit = max(1, adj_block_budget // max(1, N * N * adj_itemsize))
    if G <= min(max_gb, fit):
        return G, G                     # one block; full-extent dims always legal
    # Blocked (gb, N) output rows live on sublanes -> gb must be a multiple of 8.
    gb = max(8, (min(max_gb, fit) // 8) * 8)
    g_pad = -(-G // gb) * gb
    return gb, g_pad


# ----------------------------------------------------------------------------
# Wrappers
# ----------------------------------------------------------------------------
def m_gcn_forward_batched(adj, feat, params, lmb, *, matmul_dtype=jnp.float32,
                          max_graphs_per_block=8):
    """adj: (G, N, N), feat: (G, N, F) -> (G, N, 1). One fused pallas_call."""
    adj = jnp.asarray(adj)
    feat = jnp.asarray(feat, jnp.float32)
    G, N, _ = adj.shape
    F = feat.shape[-1]

    gc1_w = jnp.asarray(params["gc1_w"], jnp.float32)   # (F, H)
    gc2_w = jnp.asarray(params["gc2_w"], jnp.float32)   # (H, C)
    fc1_w = jnp.asarray(params["fc1_w"], jnp.float32)   # (C, FH)
    H, C, FH = gc1_w.shape[1], gc2_w.shape[1], fc1_w.shape[1]
    assert gc2_w.shape[0] == H and fc1_w.shape[0] == C
    assert max(F, H, C, FH) <= 128, "single-slab packing assumes widths <= 128"
    # TODO(synk): beyond the per-generation VMEM ceiling (N ~2k f32 / ~3k bf16 on
    # v7x, ~3.5k / ~5k on v5e/v6e) the (N,N) adjacency no longer fits one VMEM
    # block; propagate() would need a tiled (row,col) grid + f32 accumulator.

    # Ship the adjacency already in the matmul operand dtype (bf16 halves the
    # dominant HBM DMA + VMEM buffer); accumulation stays f32 in-kernel.
    adj = adj.astype(matmul_dtype)

    lmb = jnp.asarray(lmb, jnp.float32)
    if lmb.ndim == 0:
        lmb = jnp.full((G,), lmb, jnp.float32)
    assert lmb.shape == (G,)

    gb, g_pad = _choose_graphs_per_block(G, N, adj.dtype.itemsize,
                                         max_gb=max_graphs_per_block)
    if g_pad > G:
        pad = g_pad - G
        adj = jnp.pad(adj, ((0, pad), (0, 0), (0, 0)))
        feat = jnp.pad(feat, ((0, pad), (0, 0), (0, 0)))
        lmb = jnp.pad(lmb, (0, pad))

    o_gc1, o_gc2, o_fc1, slab_rows = _slab_offsets(F, H, C)
    slab = _pack_params(params, F, H, C, FH)
    fc2_b = jnp.asarray(params["fc2_b"], jnp.float32).reshape(1)

    kernel = functools.partial(
        m_gcn_fused_kernel, gb=gb, feat_dim=F, gcn_hidden=H, gcn_feat=C,
        fc_hidden=FH, o_gc1=o_gc1, o_gc2=o_gc2, o_fc1=o_fc1,
        matmul_dtype=matmul_dtype)

    grid_spec = pltpu.PrefetchScalarGridSpec(
        num_scalar_prefetch=2,                       # lmb (per graph), fc2 bias
        grid=(g_pad // gb,),
        in_specs=[
            pl.BlockSpec((gb, N, N), lambda b, _l, _b2: (b, 0, 0)),   # adj
            pl.BlockSpec((gb, N, F), lambda b, _l, _b2: (b, 0, 0)),   # feat
            pl.BlockSpec((slab_rows, 128), lambda b, _l, _b2: (0, 0)),  # params
        ],
        out_specs=pl.BlockSpec((gb, N), lambda b, _l, _b2: (b, 0)),   # lane-dense
    )

    out = pl.pallas_call(
        kernel,
        out_shape=jax.ShapeDtypeStruct((g_pad, N), jnp.float32),
        grid_spec=grid_spec,
        compiler_params=pltpu.CompilerParams(
            dimension_semantics=("parallel",),        # megacore split on v7x
            vmem_limit_bytes=_vmem_limit_bytes(),     # per-generation budget
        ),
    )(lmb, fc2_b, adj, feat, slab)

    return out[:G].reshape(G, N, 1)


def m_gcn_forward(adj_list, feat_list, params, lmb_list, *,
                  matmul_dtype=jnp.float32):
    """Module-style forward (spatial-only default config): (N, N), (N, F) -> (N, 1)."""
    # TODO(synk): temporal/neighbor branches (disabled in the default config)
    # would be extra grid-batched GCN passes concatenated on the feature axis
    # before the fc head.
    # TODO(synk): with a single graph the grid has one step, so v7x's second
    # TensorCore idles; a node-row tile axis over N would be needed to use it.
    out = m_gcn_forward_batched(
        adj_list[0][None], feat_list[0][None], params, lmb_list[0],
        matmul_dtype=matmul_dtype)
    return out[0]


# ----------------------------------------------------------------------------
# Pure-JAX reference (literal transliteration of the PyTorch module, 1 graph)
# ----------------------------------------------------------------------------
def m_gcn_reference(adj, feat, params, lmb):
    adj = jnp.asarray(adj, jnp.float32)
    feat = jnp.asarray(feat, jnp.float32)
    N = adj.shape[0]
    A = adj + lmb * jnp.eye(N, dtype=jnp.float32)
    Dinv = jnp.diag(1.0 / jnp.sqrt(jnp.sum(A, axis=1)))
    A = Dinv @ A @ Dinv
    X = jax.nn.relu(A @ feat @ params["gc1_w"] + params["gc1_b"])
    X = jax.nn.relu(A @ X @ params["gc2_w"] + params["gc2_b"])

    def bn(x, g, b):
        mu = jnp.mean(x, axis=0, keepdims=True)
        var = jnp.mean(jnp.square(x - mu), axis=0, keepdims=True)
        return (x - mu) / jnp.sqrt(var + 1e-5) * g + b

    x = bn(X, params["bn1_g"], params["bn1_b"])
    y = x @ params["fc1_w"] + params["fc1_b"]
    y = bn(y, params["bn2_g"], params["bn2_b"])
    y = jnp.where(y > 0.0, y, 0.01 * y)
    return y @ params["fc2_w"] + params["fc2_b"]


# ----------------------------------------------------------------------------
# Deterministic parameter init (synthetic, not a checkpoint load)
# ----------------------------------------------------------------------------
def init_params(key, graph_feature_num, gcn_hidden, gcn_feature_num, fc_hidden):
    ks = jax.random.split(key, 8)
    scale = 0.1
    # Linear weights stored pre-transposed as (in, out) so the kernel does x @ W.
    gc1_w = scale * jax.random.normal(ks[0], (graph_feature_num, gcn_hidden), jnp.float32)
    gc1_b = scale * jax.random.normal(ks[1], (1, gcn_hidden), jnp.float32)
    gc2_w = scale * jax.random.normal(ks[2], (gcn_hidden, gcn_feature_num), jnp.float32)
    gc2_b = scale * jax.random.normal(ks[3], (1, gcn_feature_num), jnp.float32)

    gcn_out_dim = gcn_feature_num   # only the spatial branch is enabled
    fc1_w = scale * jax.random.normal(ks[4], (gcn_out_dim, fc_hidden), jnp.float32)
    fc1_b = scale * jax.random.normal(ks[5], (1, fc_hidden), jnp.float32)
    fc2_w = scale * jax.random.normal(ks[6], (fc_hidden, 1), jnp.float32)
    fc2_b = scale * jax.random.normal(ks[7], (1, 1), jnp.float32)

    # BatchNorm affine params at PyTorch defaults (gamma=1, beta=0).
    return dict(
        gc1_w=gc1_w, gc1_b=gc1_b, gc2_w=gc2_w, gc2_b=gc2_b,
        bn1_g=jnp.ones((1, gcn_out_dim), jnp.float32),
        bn1_b=jnp.zeros((1, gcn_out_dim), jnp.float32),
        fc1_w=fc1_w, fc1_b=fc1_b,
        bn2_g=jnp.ones((1, fc_hidden), jnp.float32),
        bn2_b=jnp.zeros((1, fc_hidden), jnp.float32),
        fc2_w=fc2_w, fc2_b=fc2_b,
    )


if __name__ == "__main__":
    import numpy as np

    node_num = 8
    graph_feature_num = 16
    gcn_hidden_size = 32
    fc_hidden_size = 32
    gcn_feature_num = 8
    lmb_list = [1.0, 1.0, 1.0]   # deterministic stand-in for yaml self_enhance lambdas

    key = jax.random.PRNGKey(0)
    k_adj, k_feat, k_params = jax.random.split(key, 3)

    # adjacency in [0,1): positive row sums so D^-1/2 is well defined
    adj = jax.random.uniform(k_adj, (node_num, node_num), jnp.float32)
    feat = jax.random.normal(k_feat, (node_num, graph_feature_num), jnp.float32)
    params = init_params(k_params, graph_feature_num, gcn_hidden_size,
                         gcn_feature_num, fc_hidden_size)

    # 1) Module-style single-graph forward (spatial branch, default config).
    out = m_gcn_forward([adj, None, None], [feat, None, None], params, lmb_list)
    out = jax.block_until_ready(out)
    assert out.shape == (node_num, 1) and out.dtype == jnp.float32
    ref = m_gcn_reference(adj, feat, params, lmb_list[0])
    np.testing.assert_allclose(np.asarray(out), np.asarray(ref),
                               rtol=2e-3, atol=2e-3)

    # 2) Batched path: several independent graphs in one grid step.
    g = 4
    adj_b = jax.random.uniform(jax.random.PRNGKey(1),
                               (g, node_num, node_num), jnp.float32)
    feat_b = jax.random.normal(jax.random.PRNGKey(2),
                               (g, node_num, graph_feature_num), jnp.float32)
    out_b = jax.block_until_ready(
        m_gcn_forward_batched(adj_b, feat_b, params, lmb_list[0]))
    assert out_b.shape == (g, node_num, 1)
    for i in (0, g - 1):
        ref_i = m_gcn_reference(adj_b[i], feat_b[i], params, lmb_list[0])
        np.testing.assert_allclose(np.asarray(out_b[i]), np.asarray(ref_i),
                                   rtol=2e-3, atol=2e-3)

    # 3) Batched path with multiple grid steps (exercises gb=8 blocking + padding).
    g2 = 12
    adj_c = jax.random.uniform(jax.random.PRNGKey(3),
                               (g2, node_num, node_num), jnp.float32)
    feat_c = jax.random.normal(jax.random.PRNGKey(4),
                               (g2, node_num, graph_feature_num), jnp.float32)
    out_c = jax.block_until_ready(
        m_gcn_forward_batched(adj_c, feat_c, params, lmb_list[0]))
    assert out_c.shape == (g2, node_num, 1)
    for i in (0, g2 - 1):
        ref_i = m_gcn_reference(adj_c[i], feat_c[i], params, lmb_list[0])
        np.testing.assert_allclose(np.asarray(out_c[i]), np.asarray(ref_i),
                                   rtol=2e-3, atol=2e-3)

    # 4) bf16 matmul operands (halved adjacency DMA, f32 accumulation) — perf config.
    out_bf16 = jax.block_until_ready(
        m_gcn_forward_batched(adj_b, feat_b, params, lmb_list[0],
                              matmul_dtype=jnp.bfloat16))
    assert out_bf16.shape == (g, node_num, 1)
    assert bool(jnp.all(jnp.isfinite(out_bf16)))

    print("KERNEL_OK")
</pallas_src>

<mosaic_0001>
module attributes {stable_mosaic.version = 11 : i64} {
  func.func @m_gcn_fused_kernel(%arg0: i32, %arg1: memref<1xf32, #tpu.memory_space<smem>>, %arg2: memref<1xf32, #tpu.memory_space<smem>>, %arg3: memref<1x8x8xf32, #tpu.memory_space<vmem>>, %arg4: memref<1x8x16xf32, #tpu.memory_space<vmem>>, %arg5: memref<72x128xf32, #tpu.memory_space<vmem>>, %arg6: memref<1x8xf32, #tpu.memory_space<vmem>>) attributes {dimension_semantics = [#tpu.dimension_semantics<parallel>], iteration_bounds = array<i64: 1>, scalar_prefetch = 2 : i64, scratch_operands = 0 : i64, tpu.core_type = #tpu.core_type<tc>, window_params = [{transform_indices = @transform_0, window_bounds = array<i64: 1, 8, 8>}, {transform_indices = @transform_1, window_bounds = array<i64: 1, 8, 16>}, {pipeline_mode = #tpu.pipeline_mode<synchronous>, transform_indices = @transform_2, window_bounds = array<i64: 72, 128>}, {transform_indices = @transform_3, window_bounds = array<i64: 1, 8>}]} {
    %c0 = arith.constant 0 : index
    %c0_0 = arith.constant 0 : index
    %0 = vector.load %arg5[%c0, %c0_0] : memref<72x128xf32, #tpu.memory_space<vmem>>, vector<1x32xf32>
    %c1 = arith.constant 1 : index
    %c0_1 = arith.constant 0 : index
    %1 = vector.load %arg5[%c1, %c0_1] : memref<72x128xf32, #tpu.memory_space<vmem>>, vector<1x8xf32>
    %c2 = arith.constant 2 : index
    %c0_2 = arith.constant 0 : index
    %2 = vector.load %arg5[%c2, %c0_2] : memref<72x128xf32, #tpu.memory_space<vmem>>, vector<1x8xf32>
    %c3 = arith.constant 3 : index
    %c0_3 = arith.constant 0 : index
    %3 = vector.load %arg5[%c3, %c0_3] : memref<72x128xf32, #tpu.memory_space<vmem>>, vector<1x8xf32>
    %c4 = arith.constant 4 : index
    %c0_4 = arith.constant 0 : index
    %4 = vector.load %arg5[%c4, %c0_4] : memref<72x128xf32, #tpu.memory_space<vmem>>, vector<1x32xf32>
    %c5 = arith.constant 5 : index
    %c0_5 = arith.constant 0 : index
    %5 = vector.load %arg5[%c5, %c0_5] : memref<72x128xf32, #tpu.memory_space<vmem>>, vector<1x32xf32>
    %c6 = arith.constant 6 : index
    %c0_6 = arith.constant 0 : index
    %6 = vector.load %arg5[%c6, %c0_6] : memref<72x128xf32, #tpu.memory_space<vmem>>, vector<1x32xf32>
    %c7 = arith.constant 7 : index
    %c0_7 = arith.constant 0 : index
    %7 = vector.load %arg5[%c7, %c0_7] : memref<72x128xf32, #tpu.memory_space<vmem>>, vector<1x32xf32>
    %c0_8 = arith.constant 0 : index
    %8 = memref.load %arg2[%c0_8] : memref<1xf32, #tpu.memory_space<smem>>
    %c16 = arith.constant 16 : index
    %c0_9 = arith.constant 0 : index
    %9 = vector.load %arg5[%c16, %c0_9] : memref<72x128xf32, #tpu.memory_space<vmem>>, vector<16x32xf32>
    %c32 = arith.constant 32 : index
    %c0_10 = arith.constant 0 : index
    %10 = vector.load %arg5[%c32, %c0_10] : memref<72x128xf32, #tpu.memory_space<vmem>>, vector<32x8xf32>
    %c64 = arith.constant 64 : index
    %c0_11 = arith.constant 0 : index
    %11 = vector.load %arg5[%c64, %c0_11] : memref<72x128xf32, #tpu.memory_space<vmem>>, vector<8x32xf32>
    %c1_i32 = arith.constant 1 : i32
    %12 = arith.muli %arg0, %c1_i32 : i32
    %c0_i32 = arith.constant 0 : i32
    %13 = arith.addi %12, %c0_i32 : i32
    %14 = arith.index_cast %13 : i32 to index
    %15 = memref.load %arg1[%14] : memref<1xf32, #tpu.memory_space<smem>>
    %c0_12 = arith.constant 0 : index
    %c0_13 = arith.constant 0 : index
    %c0_14 = arith.constant 0 : index
    %16 = vector.load %arg3[%c0_12, %c0_13, %c0_14] : memref<1x8x8xf32, #tpu.memory_space<vmem>>, vector<1x8x8xf32>
    %17 = vector.shape_cast %16 : vector<1x8x8xf32> to vector<8x8xf32>
    %c0_15 = arith.constant 0 : index
    %c0_16 = arith.constant 0 : index
    %c0_17 = arith.constant 0 : index
    %18 = vector.load %arg4[%c0_15, %c0_16, %c0_17] : memref<1x8x16xf32, #tpu.memory_space<vmem>>, vector<1x8x16xf32>
    %19 = vector.shape_cast %18 : vector<1x8x16xf32> to vector<8x16xf32>
    %cst = arith.constant dense<0.000000e+00> : vector<8xf32>
    %20 = vector.multi_reduction <add>, %17, %cst [1] : vector<8x8xf32> to vector<8xf32>
    %21 = vector.shape_cast %20 : vector<8xf32> to vector<8x1xf32>
    %22 = vector.broadcast %15 : f32 to vector<8x1xf32>
    %23 = arith.addf %21, %22 : vector<8x1xf32>
    %cst_18 = arith.constant 0.000000e+00 : f32
    %24 = vector.broadcast %cst_18 : f32 to vector<8x1xf32>
    %25 = arith.cmpf ogt, %23, %24 : vector<8x1xf32>
    %cst_19 = arith.constant 1.000000e-30 : f32
    %26 = vector.broadcast %cst_19 : f32 to vector<8x1xf32>
    %27 = arith.maximumf %23, %26 : vector<8x1xf32>
    %28 = math.rsqrt %27 : vector<8x1xf32>
    %cst_20 = arith.constant 0.000000e+00 : f32
    %29 = vector.broadcast %cst_20 : f32 to vector<8x1xf32>
    %30 = arith.select %25, %28, %29 : vector<8x1xi1>, vector<8x1xf32>
    %31 = vector.broadcast %15 : f32 to vector<8x1xf32>
    %32 = arith.mulf %31, %30 : vector<8x1xf32>
    %33 = arith.mulf %32, %30 : vector<8x1xf32>
    %34 = vector.broadcast %30 : vector<8x1xf32> to vector<8x16xf32>
    %35 = arith.mulf %34, %19 : vector<8x16xf32>
    %cst_21 = arith.constant dense<0.000000e+00> : vector<8x16xf32>
    %36 = tpu.matmul %17, %35, %cst_21 {dimension_numbers = #tpu.dot_dimension_numbers<[1], [0], [0], [1], [0, 0, 1, 1], [], []>} : vector<8x8xf32>, vector<8x16xf32>, vector<8x16xf32> -> vector<8x16xf32>
    %37 = vector.broadcast %30 : vector<8x1xf32> to vector<8x16xf32>
    %38 = arith.mulf %37, %36 : vector<8x16xf32>
    %39 = vector.broadcast %33 : vector<8x1xf32> to vector<8x16xf32>
    %40 = arith.mulf %39, %19 : vector<8x16xf32>
    %41 = arith.addf %38, %40 : vector<8x16xf32>
    %cst_22 = arith.constant dense<0.000000e+00> : vector<8x32xf32>
    %42 = tpu.matmul %41, %9, %cst_22 {dimension_numbers = #tpu.dot_dimension_numbers<[1], [0], [0], [1], [0, 0, 1, 1], [], []>} : vector<8x16xf32>, vector<16x32xf32>, vector<8x32xf32> -> vector<8x32xf32>
    %43 = vector.broadcast %0 : vector<1x32xf32> to vector<8x32xf32>
    %44 = arith.addf %42, %43 : vector<8x32xf32>
    %cst_23 = arith.constant 0.000000e+00 : f32
    %45 = vector.broadcast %cst_23 : f32 to vector<8x32xf32>
    %46 = arith.maximumf %44, %45 : vector<8x32xf32>
    %47 = vector.broadcast %30 : vector<8x1xf32> to vector<8x32xf32>
    %48 = arith.mulf %47, %46 : vector<8x32xf32>
    %cst_24 = arith.constant dense<0.000000e+00> : vector<8x32xf32>
    %49 = tpu.matmul %17, %48, %cst_24 {dimension_numbers = #tpu.dot_dimension_numbers<[1], [0], [0], [1], [0, 0, 1, 1], [], []>} : vector<8x8xf32>, vector<8x32xf32>, vector<8x32xf32> -> vector<8x32xf32>
    %50 = vector.broadcast %30 : vector<8x1xf32> to vector<8x32xf32>
    %51 = arith.mulf %50, %49 : vector<8x32xf32>
    %52 = vector.broadcast %33 : vector<8x1xf32> to vector<8x32xf32>
    %53 = arith.mulf %52, %46 : vector<8x32xf32>
    %54 = arith.addf %51, %53 : vector<8x32xf32>
    %cst_25 = arith.constant dense<0.000000e+00> : vector<8x8xf32>
    %55 = tpu.matmul %54, %10, %cst_25 {dimension_numbers = #tpu.dot_dimension_numbers<[1], [0], [0], [1], [0, 0, 1, 1], [], []>} : vector<8x32xf32>, vector<32x8xf32>, vector<8x8xf32> -> vector<8x8xf32>
    %56 = vector.broadcast %1 : vector<1x8xf32> to vector<8x8xf32>
    %57 = arith.addf %55, %56 : vector<8x8xf32>
    %cst_26 = arith.constant 0.000000e+00 : f32
    %58 = vector.broadcast %cst_26 : f32 to vector<8x8xf32>
    %59 = arith.maximumf %57, %58 : vector<8x8xf32>
    %cst_27 = arith.constant dense<0.000000e+00> : vector<8xf32>
    %60 = vector.multi_reduction <add>, %59, %cst_27 [0] : vector<8x8xf32> to vector<8xf32>
    %61 = vector.shape_cast %60 : vector<8xf32> to vector<1x8xf32>
    %cst_28 = arith.constant 8.000000e+00 : f32
    %62 = vector.broadcast %cst_28 : f32 to vector<1x8xf32>
    %63 = arith.divf %61, %62 : vector<1x8xf32>
    %64 = arith.mulf %59, %59 : vector<8x8xf32>
    %cst_29 = arith.constant dense<0.000000e+00> : vector<8xf32>
    %65 = vector.multi_reduction <add>, %64, %cst_29 [0] : vector<8x8xf32> to vector<8xf32>
    %66 = vector.shape_cast %65 : vector<8xf32> to vector<1x8xf32>
    %cst_30 = arith.constant 8.000000e+00 : f32
    %67 = vector.broadcast %cst_30 : f32 to vector<1x8xf32>
    %68 = arith.divf %66, %67 : vector<1x8xf32>
    %69 = arith.mulf %63, %63 : vector<1x8xf32>
    %70 = arith.subf %68, %69 : vector<1x8xf32>
    %cst_31 = arith.constant 0.000000e+00 : f32
    %71 = vector.broadcast %cst_31 : f32 to vector<1x8xf32>
    %72 = arith.maximumf %70, %71 : vector<1x8xf32>
    %73 = vector.broadcast %63 : vector<1x8xf32> to vector<8x8xf32>
    %74 = arith.subf %59, %73 : vector<8x8xf32>
    %cst_32 = arith.constant 9.99999974E-6 : f32
    %75 = vector.broadcast %cst_32 : f32 to vector<1x8xf32>
    %76 = arith.addf %72, %75 : vector<1x8xf32>
    %77 = math.rsqrt %76 : vector<1x8xf32>
    %78 = vector.broadcast %77 : vector<1x8xf32> to vector<8x8xf32>
    %79 = arith.mulf %74, %78 : vector<8x8xf32>
    %80 = vector.broadcast %2 : vector<1x8xf32> to vector<8x8xf32>
    %81 = arith.mulf %79, %80 : vector<8x8xf32>
    %82 = vector.broadcast %3 : vector<1x8xf32> to vector<8x8xf32>
    %83 = arith.addf %81, %82 : vector<8x8xf32>
    %cst_33 = arith.constant dense<0.000000e+00> : vector<8x32xf32>
    %84 = tpu.matmul %83, %11, %cst_33 {dimension_numbers = #tpu.dot_dimension_numbers<[1], [0], [0], [1], [0, 0, 1, 1], [], []>} : vector<8x8xf32>, vector<8x32xf32>, vector<8x32xf32> -> vector<8x32xf32>
    %85 = vector.broadcast %4 : vector<1x32xf32> to vector<8x32xf32>
    %86 = arith.addf %84, %85 : vector<8x32xf32>
    %cst_34 = arith.constant dense<0.000000e+00> : vector<32xf32>
    %87 = vector.multi_reduction <add>, %86, %cst_34 [0] : vector<8x32xf32> to vector<32xf32>
    %88 = vector.shape_cast %87 : vector<32xf32> to vector<1x32xf32>
    %cst_35 = arith.constant 8.000000e+00 : f32
    %89 = vector.broadcast %cst_35 : f32 to vector<1x32xf32>
    %90 = arith.divf %88, %89 : vector<1x32xf32>
    %91 = arith.mulf %86, %86 : vector<8x32xf32>
    %cst_36 = arith.constant dense<0.000000e+00> : vector<32xf32>
    %92 = vector.multi_reduction <add>, %91, %cst_36 [0] : vector<8x32xf32> to vector<32xf32>
    %93 = vector.shape_cast %92 : vector<32xf32> to vector<1x32xf32>
    %cst_37 = arith.constant 8.000000e+00 : f32
    %94 = vector.broadcast %cst_37 : f32 to vector<1x32xf32>
    %95 = arith.divf %93, %94 : vector<1x32xf32>
    %96 = arith.mulf %90, %90 : vector<1x32xf32>
    %97 = arith.subf %95, %96 : vector<1x32xf32>
    %cst_38 = arith.constant 0.000000e+00 : f32
    %98 = vector.broadcast %cst_38 : f32 to vector<1x32xf32>
    %99 = arith.maximumf %97, %98 : vector<1x32xf32>
    %100 = vector.broadcast %90 : vector<1x32xf32> to vector<8x32xf32>
    %101 = arith.subf %86, %100 : vector<8x32xf32>
    %cst_39 = arith.constant 9.99999974E-6 : f32
    %102 = vector.broadcast %cst_39 : f32 to vector<1x32xf32>
    %103 = arith.addf %99, %102 : vector<1x32xf32>
    %104 = math.rsqrt %103 : vector<1x32xf32>
    %105 = vector.broadcast %104 : vector<1x32xf32> to vector<8x32xf32>
    %106 = arith.mulf %101, %105 : vector<8x32xf32>
    %107 = vector.broadcast %5 : vector<1x32xf32> to vector<8x32xf32>
    %108 = arith.mulf %106, %107 : vector<8x32xf32>
    %109 = vector.broadcast %6 : vector<1x32xf32> to vector<8x32xf32>
    %110 = arith.addf %108, %109 : vector<8x32xf32>
    %cst_40 = arith.constant 0.000000e+00 : f32
    %111 = vector.broadcast %cst_40 : f32 to vector<8x32xf32>
    %112 = arith.cmpf ogt, %110, %111 : vector<8x32xf32>
    %cst_41 = arith.constant 0.00999999977 : f32
    %113 = vector.broadcast %cst_41 : f32 to vector<8x32xf32>
    %114 = arith.mulf %113, %110 : vector<8x32xf32>
    %115 = arith.select %112, %110, %114 : vector<8x32xi1>, vector<8x32xf32>
    %116 = vector.broadcast %7 : vector<1x32xf32> to vector<8x32xf32>
    %117 = arith.mulf %115, %116 : vector<8x32xf32>
    %cst_42 = arith.constant dense<0.000000e+00> : vector<8xf32>
    %118 = vector.multi_reduction <add>, %117, %cst_42 [1] : vector<8x32xf32> to vector<8xf32>
    %119 = vector.broadcast %8 : f32 to vector<8xf32>
    %120 = arith.addf %118, %119 : vector<8xf32>
    %c0_43 = arith.constant 0 : index
    %c0_44 = arith.constant 0 : index
    %121 = vector.load %arg6[%c0_43, %c0_44] : memref<1x8xf32, #tpu.memory_space<vmem>>, vector<1x8xf32>
    %122 = vector.shape_cast %121 : vector<1x8xf32> to vector<8xf32>
    %123 = vector.shape_cast %120 : vector<8xf32> to vector<1x8xf32>
    tpu.vector_store %arg6[%c0_43, %c0_44], %123 {strides = array<i32>} : memref<1x8xf32, #tpu.memory_space<vmem>>, vector<1x8xf32>,
    return
  }
  func.func @transform_0(%arg0: i32, %arg1: memref<1xf32, #tpu.memory_space<smem>>, %arg2: memref<1xf32, #tpu.memory_space<smem>>) -> (i32, i32, i32) {
    %c0_i32 = arith.constant 0 : i32
    %c0_i32_0 = arith.constant 0 : i32
    %c0_i32_1 = arith.constant 0 : i32
    return %arg0, %c0_i32, %c0_i32_0 : i32, i32, i32
  }
  func.func @transform_1(%arg0: i32, %arg1: memref<1xf32, #tpu.memory_space<smem>>, %arg2: memref<1xf32, #tpu.memory_space<smem>>) -> (i32, i32, i32) {
    %c0_i32 = arith.constant 0 : i32
    %c0_i32_0 = arith.constant 0 : i32
    %c0_i32_1 = arith.constant 0 : i32
    return %arg0, %c0_i32, %c0_i32_0 : i32, i32, i32
  }
  func.func @transform_2(%arg0: i32, %arg1: memref<1xf32, #tpu.memory_space<smem>>, %arg2: memref<1xf32, #tpu.memory_space<smem>>) -> (i32, i32) {
    %c0_i32 = arith.constant 0 : i32
    %c0_i32_0 = arith.constant 0 : i32
    %c0_i32_1 = arith.constant 0 : i32
    return %c0_i32, %c0_i32_0 : i32, i32
  }
  func.func @transform_3(%arg0: i32, %arg1: memref<1xf32, #tpu.memory_space<smem>>, %arg2: memref<1xf32, #tpu.memory_space<smem>>) -> (i32, i32) {
    %c0_i32 = arith.constant 0 : i32
    %c0_i32_0 = arith.constant 0 : i32
    return %arg0, %c0_i32 : i32, i32
  }
}

</mosaic_0001>

<llo_original>
// kernel: tpu_custom_call.1
$region0: #{tpu_custom_call.1}
  #allocation0 [shape = 'u32[]', space=smem, size = 0x4, offset = 0x4, fixed_abs, tag = 'smem constant byte address 0x4 - core index']
  #allocation1 [shape = 'u32[72,128]{1,0:T(1,128)}', space=vmem, size = 0x9000, scoped, tag = 'internal scratch']
  #allocation2 [shape = 's32[1]{0}', space=sflag, size = 0x4, scoped, tag = 'scoped memory for tpu_custom_call.1']
  #allocation3 [shape = 'f32[1]{0:T(128)S(6)}', space=smem, size = 0x200, scoped, tag = 'prefetched SMEM operand 0']
  #allocation4 [shape = 'f32[1]{0:T(128)S(6)}', space=smem, size = 0x200, scoped, tag = 'prefetched SMEM operand 1']
  %s0 = inlined_call_operand.<no memory space> [shape: f32[1], index: 0, kind: input, shape index: {}]
  %s1 = inlined_call_operand.<no memory space> [shape: f32[1], index: 1, kind: input, shape index: {}]
  %s2 = inlined_call_operand.hbm [shape: f32[1,8,8], index: 2, kind: input, shape index: {}]
  %s3 = inlined_call_operand.hbm [shape: f32[1,8,16], index: 3, kind: input, shape index: {}]
  %s4 = inlined_call_operand.hbm [shape: f32[72,128], index: 4, kind: input, shape index: {}]
  %s5 = inlined_call_operand.hbm [shape: f32[1,8], index: 5, kind: output, shape index: {}]
  %s6 = sld [smem:[#allocation0]]
  $region34: #{tpu_custom_call.1} parent=0
    _
  %s8 = ssub.s32 1, %s6
  %s9 = scalar_select 0, %s8, %s6
  %10 = sst [smem:[#allocation3]] %s0
  %11 = sst [smem:[#allocation4]] %s1
  $region1: #{tpu_custom_call.1} parent=0
    #allocation5 [shape = 'u8[4096]{0}', space=vmem, size = 0x1000, scoped, tag = 'input window, operand 2, single buffered']
    #allocation6 [shape = 's32[1]{0}', space=sflag, size = 0x4, scoped, tag = 'scoped memory for tpu_custom_call.1']
    #allocation7 [shape = 's32[1]{0}', space=sflag, size = 0x4, scoped, tag = 'scoped memory for tpu_custom_call.1']
    #allocation8 [shape = 'u8[4096]{0}', space=vmem, size = 0x1000, scoped, tag = 'input window, operand 3, single buffered']
    #allocation9 [shape = 's32[1]{0}', space=sflag, size = 0x4, scoped, tag = 'scoped memory for tpu_custom_call.1']
    #allocation10 [shape = 'u8[36864]{0}', space=vmem, size = 0x9000, scoped, tag = 'input window, operand 4, single buffered']
    #allocation11 [shape = 'u8[512]{0}', space=vmem, size = 0x400, scoped, tag = 'output window, operand 0, single buffered']
    %12 = vsyncpa [#allocation6], 0
    %13 = vsyncpa [#allocation9], 0
    %14 = vsyncpa [#allocation7], 0
    // Predicated region
    $region2: #{tpu_custom_call.1} parent=1 // pred_check
      _
    $region3: #{tpu_custom_call.1} parent=1 // pred_check_branch
      %16 = sbr.rel (0) target = $region5
    $region4: #{tpu_custom_call.1} parent=1 // pred_region
      %18 = vsyncadd [#allocation6], 0
      %s20 = sshll.u32 %s2, 4
      %s21 = int_to_ptr.hbm [resolvable:$true] %s20
      %s22 = sshll.u32 [#allocation5], 4
      %s23 = int_to_ptr.vmem [resolvable:$true] %s22
      %25 = dma.hbm_to_vmem [thread:$0]  %s21, 128, %s23, [#allocation6]
    $region5: #{tpu_custom_call.1} parent=1 // pred_fallthru
      _
    // Predicated region
    $region6: #{tpu_custom_call.1} parent=1 // pred_check
      _
    $region7: #{tpu_custom_call.1} parent=1 // pred_check_branch
      %27 = sbr.rel (0) target = $region9
    $region8: #{tpu_custom_call.1} parent=1 // pred_region
      %29 = vsyncadd [#allocation9], 0
      %s31 = sshll.u32 %s3, 4
      %s32 = int_to_ptr.hbm [resolvable:$true] %s31
      %s33 = sshll.u32 [#allocation8], 4
      %s34 = int_to_ptr.vmem [resolvable:$true] %s33
      %36 = dma.hbm_to_vmem [thread:$0]  %s32, 128, %s34, [#allocation9]
    $region9: #{tpu_custom_call.1} parent=1 // pred_fallthru
      _
    // Predicated region
    $region10: #{tpu_custom_call.1} parent=1 // pred_check
      _
    $region11: #{tpu_custom_call.1} parent=1 // pred_check_branch
      %38 = sbr.rel (0) target = $region13
    $region12: #{tpu_custom_call.1} parent=1 // pred_region
      %40 = vsyncadd [#allocation9], 0
      %s41 = sshll.u32 %s4, 4
      %s42 = int_to_ptr.hbm [resolvable:$true] %s41
      %s43 = sshll.u32 [#allocation10], 4
      %s44 = int_to_ptr.vmem [resolvable:$true] %s43
      %49 = dma.hbm_to_vmem [thread:$0]  %s42, 1152, %s44, [#allocation9], 128, 128, 8
    $region13: #{tpu_custom_call.1} parent=1 // pred_fallthru
      _
    // Predicated region
    $region14: #{tpu_custom_call.1} parent=1 // pred_check
      _
    $region15: #{tpu_custom_call.1} parent=1 // pred_check_branch
      %51 = sbr.rel (0) target = $region17
    $region16: #{tpu_custom_call.1} parent=1 // pred_region
      %53 = dma.done [#allocation6], 128
    $region17: #{tpu_custom_call.1} parent=1 // pred_fallthru
      _
    // Predicated region
    $region18: #{tpu_custom_call.1} parent=1 // pred_check
      _
    $region19: #{tpu_custom_call.1} parent=1 // pred_check_branch
      %55 = sbr.rel (0) target = $region21
    $region20: #{tpu_custom_call.1} parent=1 // pred_region
      %57 = dma.done [#allocation9], 128
    $region21: #{tpu_custom_call.1} parent=1 // pred_fallthru
      _
    // Predicated region
    $region22: #{tpu_custom_call.1} parent=1 // pred_check
      _
    $region23: #{tpu_custom_call.1} parent=1 // pred_check_branch
      %59 = sbr.rel (0) target = $region25
    $region24: #{tpu_custom_call.1} parent=1 // pred_region
      %61 = dma.done [#allocation9], 1152
    $region25: #{tpu_custom_call.1} parent=1 // pred_fallthru
      _
    %v62 = vld [vmem:[#allocation10] sm:$0x1]
    %v63 = vld [vmem:[#allocation10 + $0x1] sm:$0x1]
    %v64 = vld [vmem:[#allocation10 + $0x2] sm:$0x1]
    %v65 = vld [vmem:[#allocation10 + $0x3] sm:$0x1]
    %v66 = vld [vmem:[#allocation10 + $0x4] sm:$0x1]
    %v67 = vld [vmem:[#allocation10 + $0x5] sm:$0x1]
    %v68 = vld [vmem:[#allocation10 + $0x6] sm:$0x1]
    %v69 = vld [vmem:[#allocation10 + $0x7] sm:$0x1]
    %s70 = sld [smem:[#allocation4]]
    %v71 = vld [vmem:[#allocation10 + $0x10] sm:$0xff]
    %v72 = vld [vmem:[#allocation10 + $0x18] sm:$0xff]
    %v73 = vld [vmem:[#allocation10 + $0x20] sm:$0xff]
    %v74 = vld [vmem:[#allocation10 + $0x28] sm:$0xff]
    %v75 = vld [vmem:[#allocation10 + $0x30] sm:$0xff]
    %v76 = vld [vmem:[#allocation10 + $0x38] sm:$0xff]
    %v77 = vld [vmem:[#allocation10 + $0x40] sm:$0xff]
    %s78 = sld [smem:[#allocation3]]
    %v79 = vld [vmem:[#allocation5] sm:$0xff]
    %v80 = vld [vmem:[#allocation8] sm:$0xff]
    %vm81 = vcmask 64512
    %v82 = vsel %vm81, %v79, 0.0
    %83 = vadd.xlane.f32.xlu0 %v82
    %v84 = vpop.xlane.xlu0 %83
    %v85 = vstv %s78
    %v86 = vadd.f32 %v84, %v85
    %vm87 = vcmp.gt.f32.partialorder %v86, 0.0
    %v88 = vmax.f32 %v86, 1e-30
    %v89 = vrsqrt.pop %v88
    %v90 = vmul.f32 %v89, %v88
    %v91 = vmul.f32 %v90, %v89
    %v92 = vmul.f32 0.5, %v91
    %v93 = vsub.f32 1.5, %v92
    %v94 = vmul.f32 %v89, %v93
    %vm95 = vweird.f32 %v88
    %vm96 = vweird.f32 %v89
    %vm97 = vmor %vm95, %vm96
    %v98 = vsel %vm97, %v89, %v94
    %v99 = vsel %vm87, %v98, 0.0
    %v100 = vmul.f32 %v85, %v99
    %v101 = vmul.f32 %v100, %v99
    %v102 = vmul.f32 %v99, %v80
    %v104 = vsel %vm81, %v79, 0
    %106 = vmatpush.msra.mxu0 0.0
    %107 = vmatpush.msra.mxu0 0.0
    %108 = vmatpush.msra.mxu0 0.0
    %109 = vmatpush.msra.mxu0 0.0
    %110 = vmatpush.msra.mxu0 0.0
    %111 = vmatpush.msra.mxu0 0.0
    %112 = vmatpush.msra.mxu0 0.0
    %113 = vmatpush.msra.mxu0 0.0
    %114 = vmatpush.msra.mxu0 0.0
    %115 = vmatpush.msra.mxu0 0.0
    %116 = vmatpush.msra.mxu0 0.0
    %117 = vmatpush.msra.mxu0 0.0
    %118 = vmatpush.msra.mxu0 0.0
    %119 = vmatpush.msra.mxu0 0.0
    %120 = vmatpush.msra.mxu0 0.0
    %121 = vmatpush.msra.mxu0 %v102
    %122 = vmatmul.f32.gmra.mxu0 %v104
    %v123 = vpop.f32.mrf.mxu0
    %v124 = vadd.f32 0.0, %v123
    %125 = vdwg.mxu0
    %v126 = vmul.f32 %v99, %v124
    %v127 = vmul.f32 %v101, %v80
    %v128 = vadd.f32 %v126, %v127
    %v129 = vperm.slane %v62, 0
    %vm130 = vcmask 130048
    %v132 = vsel %vm130, %v128, 0
    %134 = vmatpush.msra.mxu0 0.0
    %135 = vmatpush.msra.mxu0 0.0
    %136 = vmatpush.msra.mxu0 0.0
    %137 = vmatpush.msra.mxu0 0.0
    %138 = vmatpush.msra.mxu0 0.0
    %139 = vmatpush.msra.mxu0 0.0
    %140 = vmatpush.msra.mxu0 0.0
    %141 = vmatpush.msra.mxu0 0.0
    %142 = vmatpush.msra.mxu0 0.0
    %143 = vmatpush.msra.mxu0 0.0
    %144 = vmatpush.msra.mxu0 0.0
    %145 = vmatpush.msra.mxu0 0.0
    %146 = vmatpush.msra.mxu0 0.0
    %147 = vmatpush.msra.mxu0 0.0
    %148 = vmatpush.msra.mxu0 %v72
    %149 = vmatpush.msra.mxu0 %v71
    %150 = vmatmul.f32.gmra.mxu0 %v132
    %v151 = vpop.f32.mrf.mxu0
    %v152 = vadd.f32 %v129, %v151
    %153 = vdwg.mxu0
    %v154 = vmax.f32 %v152, 0.0
    %v155 = vmul.f32 %v99, %v154
    %156 = vmatpush.msra.mxu0 0.0
    %157 = vmatpush.msra.mxu0 0.0
    %158 = vmatpush.msra.mxu0 0.0
    %159 = vmatpush.msra.mxu0 0.0
    %160 = vmatpush.msra.mxu0 0.0
    %161 = vmatpush.msra.mxu0 0.0
    %162 = vmatpush.msra.mxu0 0.0
    %163 = vmatpush.msra.mxu0 0.0
    %164 = vmatpush.msra.mxu0 0.0
    %165 = vmatpush.msra.mxu0 0.0
    %166 = vmatpush.msra.mxu0 0.0
    %167 = vmatpush.msra.mxu0 0.0
    %168 = vmatpush.msra.mxu0 0.0
    %169 = vmatpush.msra.mxu0 0.0
    %170 = vmatpush.msra.mxu0 0.0
    %171 = vmatpush.msra.mxu0 %v155
    %172 = vmatmul.f32.gmra.mxu0 %v104
    %v173 = vpop.f32.mrf.mxu0
    %v174 = vadd.f32 0.0, %v173
    %175 = vdwg.mxu0
    %v176 = vmul.f32 %v99, %v174
    %v177 = vmul.f32 %v101, %v154
    %v178 = vadd.f32 %v176, %v177
    %v179 = vperm.slane %v63, 0
    %vm180 = vcmask 261120
    %v182 = vsel %vm180, %v178, 0
    %184 = vmatpush.msra.mxu0 0.0
    %185 = vmatpush.msra.mxu0 0.0
    %186 = vmatpush.msra.mxu0 0.0
    %187 = vmatpush.msra.mxu0 0.0
    %188 = vmatpush.msra.mxu0 0.0
    %189 = vmatpush.msra.mxu0 0.0
    %190 = vmatpush.msra.mxu0 0.0
    %191 = vmatpush.msra.mxu0 0.0
    %192 = vmatpush.msra.mxu0 0.0
    %193 = vmatpush.msra.mxu0 0.0
    %194 = vmatpush.msra.mxu0 0.0
    %195 = vmatpush.msra.mxu0 0.0
    %196 = vmatpush.msra.mxu0 %v76
    %197 = vmatpush.msra.mxu0 %v75
    %198 = vmatpush.msra.mxu0 %v74
    %199 = vmatpush.msra.mxu0 %v73
    %200 = vmatmul.f32.gmra.mxu0 %v182
    %v201 = vpop.f32.mrf.mxu0
    %v202 = vadd.f32 %v179, %v201
    %203 = vdwg.mxu0
    %v204 = vmax.f32 %v202, 0.0
    %v205 = vsel %vm81, %v204, 0.0
    %v206 = vrot.slane %v205, 4
    %v207 = vadd.f32 %v205, %v206
    %v208 = vrot.slane %v207, 2
    %v209 = vadd.f32 %v207, %v208
    %v210 = vrot.slane %v209, 1
    %v211 = vadd.f32 %v209, %v210
    %v212 = vrcp.pop 8.0
    %v213 = vmul.f32 8.0, %v212
    %v214 = vsub.f32 1.0, %v213
    %v215 = vmul.f32 %v212, %v214
    %v216 = vadd.f32 %v212, %v215
    %vm217 = vweird.f32 %v212
    %v218 = vsel %vm217, %v212, %v216
    %v219 = vmul.f32 %v211, %v218
    %v220 = vmul.f32 %v204, %v204
    %v221 = vsel %vm81, %v220, 0.0
    %v222 = vrot.slane %v221, 4
    %v223 = vadd.f32 %v221, %v222
    %v224 = vrot.slane %v223, 2
    %v225 = vadd.f32 %v223, %v224
    %v226 = vrot.slane %v225, 1
    %v227 = vadd.f32 %v225, %v226
    %v228 = vmul.f32 %v227, %v218
    %v229 = vmul.f32 %v219, %v219
    %v230 = vsub.f32 %v228, %v229
    %v231 = vmax.f32 %v230, 0.0
    %v232 = vsub.f32 %v204, %v219
    %v233 = vadd.f32 %v231, 1e-05
    %v234 = vrsqrt.pop %v233
    %v235 = vmul.f32 %v234, %v233
    %v236 = vmul.f32 %v235, %v234
    %v237 = vmul.f32 0.5, %v236
    %v238 = vsub.f32 1.5, %v237
    %v239 = vmul.f32 %v234, %v238
    %vm240 = vweird.f32 %v233
    %vm241 = vweird.f32 %v234
    %vm242 = vmor %vm240, %vm241
    %v243 = vsel %vm242, %v234, %v239
    %v244 = vmul.f32 %v232, %v243
    %v245 = vperm.slane %v64, 0
    %v246 = vmul.f32 %v244, %v245
    %v247 = vperm.slane %v65, 0
    %v248 = vadd.f32 %v246, %v247
    %v249 = vperm.slane %v66, 0
    %v251 = vsel %vm81, %v248, 0
    %253 = vmatpush.msra.mxu0 0.0
    %254 = vmatpush.msra.mxu0 0.0
    %255 = vmatpush.msra.mxu0 0.0
    %256 = vmatpush.msra.mxu0 0.0
    %257 = vmatpush.msra.mxu0 0.0
    %258 = vmatpush.msra.mxu0 0.0
    %259 = vmatpush.msra.mxu0 0.0
    %260 = vmatpush.msra.mxu0 0.0
    %261 = vmatpush.msra.mxu0 0.0
    %262 = vmatpush.msra.mxu0 0.0
    %263 = vmatpush.msra.mxu0 0.0
    %264 = vmatpush.msra.mxu0 0.0
    %265 = vmatpush.msra.mxu0 0.0
    %266 = vmatpush.msra.mxu0 0.0
    %267 = vmatpush.msra.mxu0 0.0
    %268 = vmatpush.msra.mxu0 %v77
    %269 = vmatmul.f32.gmra.mxu0 %v251
    %v270 = vpop.f32.mrf.mxu0
    %v271 = vadd.f32 %v249, %v270
    %272 = vdwg.mxu0
    %v273 = vsel %vm180, %v271, 0.0
    %v274 = vrot.slane %v273, 4
    %v275 = vadd.f32 %v273, %v274
    %v276 = vrot.slane %v275, 2
    %v277 = vadd.f32 %v275, %v276
    %v278 = vrot.slane %v277, 1
    %v279 = vadd.f32 %v277, %v278
    %v280 = vmul.f32 %v279, %v218
    %v281 = vmul.f32 %v271, %v271
    %v282 = vsel %vm180, %v281, 0.0
    %v283 = vrot.slane %v282, 4
    %v284 = vadd.f32 %v282, %v283
    %v285 = vrot.slane %v284, 2
    %v286 = vadd.f32 %v284, %v285
    %v287 = vrot.slane %v286, 1
    %v288 = vadd.f32 %v286, %v287
    %v289 = vmul.f32 %v288, %v218
    %v290 = vmul.f32 %v280, %v280
    %v291 = vsub.f32 %v289, %v290
    %v292 = vmax.f32 %v291, 0.0
    %v293 = vsub.f32 %v271, %v280
    %v294 = vadd.f32 %v292, 1e-05
    %v295 = vrsqrt.pop %v294
    %v296 = vmul.f32 %v295, %v294
    %v297 = vmul.f32 %v296, %v295
    %v298 = vmul.f32 0.5, %v297
    %v299 = vsub.f32 1.5, %v298
    %v300 = vmul.f32 %v295, %v299
    %vm301 = vweird.f32 %v294
    %vm302 = vweird.f32 %v295
    %vm303 = vmor %vm301, %vm302
    %v304 = vsel %vm303, %v295, %v300
    %v305 = vmul.f32 %v293, %v304
    %v306 = vperm.slane %v67, 0
    %v307 = vmul.f32 %v305, %v306
    %v308 = vperm.slane %v68, 0
    %v309 = vadd.f32 %v307, %v308
    %vm310 = vcmp.gt.f32.partialorder %v309, 0.0
    %v311 = vmul.f32 %v309, 0.01
    %v312 = vsel %vm310, %v309, %v311
    %v313 = vperm.slane %v69, 0
    %v314 = vmul.f32 %v312, %v313
    %v315 = vsel %vm180, %v314, 0.0
    %316 = vadd.xlane.f32.xlu0 %v315
    %v317 = vpop.xlane.xlu0 %316
    %v318 = vstv %s70
    %v319 = vadd.f32 %v317, %v318
    %v321 = vlaneseq
    %v322 = vand.u32 %v321, 127
    %v323 = vperm.slane %v319, %v322
    %vm325 = vcmask 57344
    %326 = vst.msk [vmem:[#allocation11] sm:$0x1] %vm325, %v323
    // Predicated region
    $region26: #{tpu_custom_call.1} parent=1 // pred_check
      _
    $region27: #{tpu_custom_call.1} parent=1 // pred_check_branch
      %328 = sbr.rel (0) target = $region29
    $region28: #{tpu_custom_call.1} parent=1 // pred_region
      %330 = vsyncadd [#allocation7], 0
      %s332 = sshll.u32 [#allocation11], 4
      %s333 = int_to_ptr.vmem [resolvable:$true] %s332
      %s334 = sshll.u32 %s5, 4
      %s335 = int_to_ptr.hbm [resolvable:$true] %s334
      %337 = dma.vmem_to_hbm [thread:$0]  %s333, 16, %s335, [#allocation7]
    $region29: #{tpu_custom_call.1} parent=1 // pred_fallthru
      _
    // Predicated region
    $region30: #{tpu_custom_call.1} parent=1 // pred_check
      _
    $region31: #{tpu_custom_call.1} parent=1 // pred_check_branch
      %339 = sbr.rel (0) target = $region33
    $region32: #{tpu_custom_call.1} parent=1 // pred_region
      %341 = dma.done [#allocation7], 16
    $region33: #{tpu_custom_call.1} parent=1 // pred_fallthru
      _
    %342 = vsyncpa [#allocation6], 1
    %343 = vsyncpa [#allocation9], 1
    %344 = vsyncpa [#allocation7], 1

</llo_original>
